<compile_context>
chip_gen: v6e
topology: v6e:2x2x1
jax: 0.10.0
libtpu: 0.0.40
codegen_flags: <defaults>
</compile_context>

<pallas_src>
import functools

import jax
import jax.numpy as jnp
from jax.experimental import pallas as pl
from jax.experimental.pallas import tpu as pltpu


_IGNORE_INDEX = -100
_LANES = 128
_SUBLANES = 8


def _kd_partial_kernel(n_ref, logits_ref, soft_ref, hard_ref, out_ref, *,
                       temperature: float, ignore_index: int):
    """One row tile -> (1, 8, 128) partial slab (only sublanes 0..2 meaningful):
         row 0: sum_rows( -sum_c softmax(soft)[c] * log_softmax(logits/T)[c] )
         row 1: sum_rows( valid * nll(logits, hard) )
         row 2: sum_rows( valid )
    Rows of the last tile that lie beyond N (uninitialized / OOB data) are discarded
    with jnp.where AFTER the per-row reductions, so any garbage/NaN they produce can
    never contaminate valid rows.
    """
    logits = logits_ref[...].astype(jnp.float32)      # (bn, C)
    soft = soft_ref[...].astype(jnp.float32)          # (bn, C)
    hard = hard_ref[...]                               # (bn, 1) int32
    bn, c = logits.shape
    inv_t = 1.0 / temperature
    n_total = n_ref[0]                                  # SMEM scalar (batch size)

    row_ids = pl.program_id(0) * bn + jax.lax.broadcasted_iota(jnp.int32, (bn, 1), 0)
    row_ok = row_ids < n_total                          # (bn, 1) bool

    # --- softmax(soft_targets): numerator + denominator only (no (bn,C)-wide divide)
    s_max = jnp.max(soft, axis=1, keepdims=True)
    s_exp = jnp.exp(soft - s_max)
    s_sum = jnp.sum(s_exp, axis=1, keepdims=True)       # (bn, 1), >= 1 for valid rows

    # --- log_softmax(logits / T); the shifted stats are reused below for the hard CE
    z = logits * inv_t
    z_max = jnp.max(z, axis=1, keepdims=True)
    z_shift = z - z_max                                  # <= 0 on valid rows
    z_lse = jnp.log(jnp.sum(jnp.exp(z_shift), axis=1, keepdims=True))
    dot_sz = jnp.sum(s_exp * z_shift, axis=1, keepdims=True)
    # -sum_c softmax(soft) * log_softmax(z)  ==  z_lse - <s_exp, z_shift> / s_sum
    per_row_soft = jnp.where(row_ok, z_lse - dot_sz / s_sum, 0.0)

    # --- hard cross entropy reusing the T-scaled stats (max is monotone for T > 0):
    #     x_shift = T*z_shift = logits - max(logits) (up to rounding)
    #     nll = logsumexp(logits) - logits[hard] = x_lse - x_shift[hard]
    x_shift = temperature * z_shift
    x_lse = jnp.log(jnp.sum(jnp.exp(x_shift), axis=1, keepdims=True))
    classes = jax.lax.broadcasted_iota(jnp.int32, (bn, c), 1)
    gathered = jnp.sum(jnp.where(classes == hard, x_shift, 0.0),
                       axis=1, keepdims=True)            # (bn, 1)
    valid_ok = jnp.logical_and(row_ok, hard != ignore_index)
    nll = jnp.where(valid_ok, x_lse - gathered, 0.0)
    cnt = jnp.where(valid_ok, 1.0, 0.0)

    p_soft = jnp.sum(per_row_soft)
    p_nll = jnp.sum(nll)
    p_valid = jnp.sum(cnt)

    # lane-dense, 8-sublane output slab (unmasked stores); rows 3..7 are zero padding
    sel = jax.lax.broadcasted_iota(jnp.int32, (1, _SUBLANES, _LANES), 1)
    out_ref[...] = jnp.where(sel == 0, p_soft,
                             jnp.where(sel == 1, p_nll,
                                       jnp.where(sel == 2, p_valid, 0.0)))


def _round_up(x: int, m: int) -> int:
    return (x + m - 1) // m * m


def _pick_block_n(n: int, c: int,
                  target_f32_bytes: int = 3 * 1024 * 1024,
                  max_rows: int = 8192) -> int:
    """Row-tile size, chosen from the f32 working set (v7x budget): ~3 MiB per input
    block, multiple of 8, never larger than the batch (last partial tile is masked
    in-kernel instead of padded in HBM)."""
    if n <= 8:
        return n                       # block dim == full array dim (allowed)
    bn = (target_f32_bytes // (c * 4)) // 8 * 8
    bn = int(max(8, min(bn, max_rows)))
    return min(bn, n // 8 * 8)         # keep block <= N; remainder rows masked


def kd_cross_entropy_with_soft_targets(logits, soft_targets, hard_targets,
                                       temperature: float):
    """Scalar distillation loss. logits/soft_targets: (N, C) f32 or bf16 (bf16 passed
    through un-upcast — kernel casts to f32 internally); hard_targets: (N,) int
    (ignore_index = -100)."""
    n, c = logits.shape
    block_n = _pick_block_n(n, c)
    num_tiles = (n + block_n - 1) // block_n

    hard2d = hard_targets.astype(jnp.int32).reshape(n, 1)
    n_arr = jnp.full((1,), n, dtype=jnp.int32)          # scalar-prefetch batch size

    kernel = functools.partial(_kd_partial_kernel,
                               temperature=float(temperature),
                               ignore_index=_IGNORE_INDEX)

    partials = pl.pallas_call(
        kernel,
        out_shape=jax.ShapeDtypeStruct((num_tiles, _SUBLANES, _LANES), jnp.float32),
        grid_spec=pltpu.PrefetchScalarGridSpec(
            num_scalar_prefetch=1,
            grid=(num_tiles,),
            in_specs=[
                pl.BlockSpec((block_n, c), lambda i, n_ref: (i, 0)),
                pl.BlockSpec((block_n, c), lambda i, n_ref: (i, 0)),
                pl.BlockSpec((block_n, 1), lambda i, n_ref: (i, 0)),
            ],
            out_specs=pl.BlockSpec((1, _SUBLANES, _LANES),
                                   lambda i, n_ref: (i, 0, 0)),
        ),
        compiler_params=pltpu.CompilerParams(
            dimension_semantics=("parallel",),
            vmem_limit_bytes=40 * 1024 * 1024,
        ),
    )(n_arr, logits, soft_targets, hard2d)

    p_soft = jnp.sum(partials[:, 0, 0])
    p_nll = jnp.sum(partials[:, 1, 0])
    p_cnt = jnp.sum(partials[:, 2, 0])

    loss_1 = jnp.float32(temperature ** 2) * p_soft / jnp.float32(n)
    loss_2 = p_nll / jnp.maximum(p_cnt, jnp.float32(1.0))
    return loss_1 + loss_2


def _reference(logits, soft_targets, hard_targets, temperature):
    """Pure-JAX reference mirroring the PyTorch module (ignore_index=-100, mean)."""
    T = temperature
    logp_z = jax.nn.log_softmax(logits.astype(jnp.float32) / T, axis=1)
    soft_p = jax.nn.softmax(soft_targets.astype(jnp.float32), axis=1)
    loss_1 = T ** 2 * jnp.mean(jnp.sum(-soft_p * logp_z, axis=1))

    logp_x = jax.nn.log_softmax(logits.astype(jnp.float32), axis=1)
    onehot = jax.nn.one_hot(jnp.maximum(hard_targets, 0), logits.shape[1],
                            dtype=jnp.float32)
    nll = -jnp.sum(onehot * logp_x, axis=1)
    valid = (hard_targets != _IGNORE_INDEX).astype(jnp.float32)
    loss_2 = jnp.sum(nll * valid) / jnp.maximum(jnp.sum(valid), 1.0)
    return loss_1 + loss_2


if __name__ == "__main__":
    key = jax.random.PRNGKey(0)
    k1, k2, k3, k4, k5, k6 = jax.random.split(key, 6)

    # Case 1: aligned small shapes (batch=8, classes=32), T=2.0
    N1, C1, T1 = 8, 32, 2.0
    logits1 = jax.random.normal(k1, (N1, C1), dtype=jnp.float32)
    soft1 = jax.random.normal(k2, (N1, C1), dtype=jnp.float32)
    hard1 = jax.random.randint(k3, (N1,), 0, C1, dtype=jnp.int32)

    out1 = jax.block_until_ready(
        kd_cross_entropy_with_soft_targets(logits1, soft1, hard1, T1))
    ref1 = _reference(logits1, soft1, hard1, T1)
    assert jnp.allclose(out1, ref1, rtol=1e-4, atol=1e-4), (out1, ref1)

    # Case 2: ragged shapes (batch=13, classes=200) exercising the masked partial
    # last row tile, non-128 class dim, and an ignore_index row. T=3.5.
    N2, C2, T2 = 13, 200, 3.5
    logits2 = jax.random.normal(k4, (N2, C2), dtype=jnp.float32)
    soft2 = jax.random.normal(k5, (N2, C2), dtype=jnp.float32)
    hard2 = jax.random.randint(k6, (N2,), 0, C2, dtype=jnp.int32)
    hard2 = hard2.at[0].set(_IGNORE_INDEX)   # one ignored row

    out2 = jax.block_until_ready(
        kd_cross_entropy_with_soft_targets(logits2, soft2, hard2, T2))
    ref2 = _reference(logits2, soft2, hard2, T2)
    assert jnp.allclose(out2, ref2, rtol=1e-4, atol=1e-4), (out2, ref2)

    print("KERNEL_OK")
</pallas_src>

<mosaic_0001>
module attributes {stable_mosaic.version = 11 : i64} {
  func.func @_kd_partial_kernel(%arg0: i32, %arg1: memref<1xi32, #tpu.memory_space<smem>>, %arg2: memref<8x32xf32, #tpu.memory_space<vmem>>, %arg3: memref<8x32xf32, #tpu.memory_space<vmem>>, %arg4: memref<8x1xi32, #tpu.memory_space<vmem>>, %arg5: memref<1x8x128xf32, #tpu.memory_space<vmem>>) attributes {dimension_semantics = [#tpu.dimension_semantics<parallel>], iteration_bounds = array<i64: 1>, scalar_prefetch = 1 : i64, scratch_operands = 0 : i64, tpu.core_type = #tpu.core_type<tc>, window_params = [{transform_indices = @transform_0, window_bounds = array<i64: 8, 32>}, {transform_indices = @transform_1, window_bounds = array<i64: 8, 32>}, {transform_indices = @transform_2, window_bounds = array<i64: 8, 1>}, {transform_indices = @transform_3, window_bounds = array<i64: 1, 8, 128>}]} {
    %c0 = arith.constant 0 : index
    %c0_0 = arith.constant 0 : index
    %0 = vector.load %arg2[%c0, %c0_0] : memref<8x32xf32, #tpu.memory_space<vmem>>, vector<8x32xf32>
    %c0_1 = arith.constant 0 : index
    %c0_2 = arith.constant 0 : index
    %1 = vector.load %arg3[%c0_1, %c0_2] : memref<8x32xf32, #tpu.memory_space<vmem>>, vector<8x32xf32>
    %c0_3 = arith.constant 0 : index
    %c0_4 = arith.constant 0 : index
    %2 = vector.load %arg4[%c0_3, %c0_4] : memref<8x1xi32, #tpu.memory_space<vmem>>, vector<8x1xi32>
    %c0_5 = arith.constant 0 : index
    %3 = memref.load %arg1[%c0_5] : memref<1xi32, #tpu.memory_space<smem>>
    %c8_i32 = arith.constant 8 : i32
    %4 = arith.muli %arg0, %c8_i32 : i32
    %5 = tpu.iota {dimensions = array<i32: 0>} : vector<8x1xi32>
    %6 = vector.broadcast %4 : i32 to vector<8x1xi32>
    %7 = arith.addi %6, %5 : vector<8x1xi32>
    %8 = vector.broadcast %3 : i32 to vector<8x1xi32>
    %9 = arith.cmpi slt, %7, %8 : vector<8x1xi32>
    %cst = arith.constant dense<0xFF800000> : vector<8xf32>
    %10 = vector.multi_reduction <maximumf>, %1, %cst [1] : vector<8x32xf32> to vector<8xf32>
    %11 = vector.shape_cast %10 : vector<8xf32> to vector<8x1xf32>
    %12 = vector.broadcast %11 : vector<8x1xf32> to vector<8x32xf32>
    %13 = arith.subf %1, %12 : vector<8x32xf32>
    %14 = math.exp %13 : vector<8x32xf32>
    %cst_6 = arith.constant dense<0.000000e+00> : vector<8xf32>
    %15 = vector.multi_reduction <add>, %14, %cst_6 [1] : vector<8x32xf32> to vector<8xf32>
    %16 = vector.shape_cast %15 : vector<8xf32> to vector<8x1xf32>
    %cst_7 = arith.constant 5.000000e-01 : f32
    %17 = vector.broadcast %cst_7 : f32 to vector<8x32xf32>
    %18 = arith.mulf %0, %17 : vector<8x32xf32>
    %cst_8 = arith.constant dense<0xFF800000> : vector<8xf32>
    %19 = vector.multi_reduction <maximumf>, %18, %cst_8 [1] : vector<8x32xf32> to vector<8xf32>
    %20 = vector.shape_cast %19 : vector<8xf32> to vector<8x1xf32>
    %21 = vector.broadcast %20 : vector<8x1xf32> to vector<8x32xf32>
    %22 = arith.subf %18, %21 : vector<8x32xf32>
    %23 = math.exp %22 : vector<8x32xf32>
    %cst_9 = arith.constant dense<0.000000e+00> : vector<8xf32>
    %24 = vector.multi_reduction <add>, %23, %cst_9 [1] : vector<8x32xf32> to vector<8xf32>
    %25 = vector.shape_cast %24 : vector<8xf32> to vector<8x1xf32>
    %26 = math.log %25 : vector<8x1xf32>
    %27 = arith.mulf %14, %22 : vector<8x32xf32>
    %cst_10 = arith.constant dense<0.000000e+00> : vector<8xf32>
    %28 = vector.multi_reduction <add>, %27, %cst_10 [1] : vector<8x32xf32> to vector<8xf32>
    %29 = vector.shape_cast %28 : vector<8xf32> to vector<8x1xf32>
    %30 = arith.divf %29, %16 : vector<8x1xf32>
    %31 = arith.subf %26, %30 : vector<8x1xf32>
    %cst_11 = arith.constant 0.000000e+00 : f32
    %32 = vector.broadcast %cst_11 : f32 to vector<8x1xf32>
    %33 = arith.select %9, %31, %32 : vector<8x1xi1>, vector<8x1xf32>
    %cst_12 = arith.constant 2.000000e+00 : f32
    %34 = vector.broadcast %cst_12 : f32 to vector<8x32xf32>
    %35 = arith.mulf %34, %22 : vector<8x32xf32>
    %36 = math.exp %35 : vector<8x32xf32>
    %cst_13 = arith.constant dense<0.000000e+00> : vector<8xf32>
    %37 = vector.multi_reduction <add>, %36, %cst_13 [1] : vector<8x32xf32> to vector<8xf32>
    %38 = vector.shape_cast %37 : vector<8xf32> to vector<8x1xf32>
    %39 = math.log %38 : vector<8x1xf32>
    %40 = tpu.iota {dimensions = array<i32: 1>} : vector<8x32xi32>
    %41 = vector.broadcast %2 : vector<8x1xi32> to vector<8x32xi32>
    %42 = arith.cmpi eq, %40, %41 : vector<8x32xi32>
    %cst_14 = arith.constant 0.000000e+00 : f32
    %43 = vector.broadcast %cst_14 : f32 to vector<8x32xf32>
    %44 = arith.select %42, %35, %43 : vector<8x32xi1>, vector<8x32xf32>
    %cst_15 = arith.constant dense<0.000000e+00> : vector<8xf32>
    %45 = vector.multi_reduction <add>, %44, %cst_15 [1] : vector<8x32xf32> to vector<8xf32>
    %46 = vector.shape_cast %45 : vector<8xf32> to vector<8x1xf32>
    %c-100_i32 = arith.constant -100 : i32
    %47 = vector.broadcast %c-100_i32 : i32 to vector<8x1xi32>
    %48 = arith.cmpi ne, %2, %47 : vector<8x1xi32>
    %49 = arith.andi %9, %48 : vector<8x1xi1>
    %50 = arith.subf %39, %46 : vector<8x1xf32>
    %cst_16 = arith.constant 0.000000e+00 : f32
    %51 = vector.broadcast %cst_16 : f32 to vector<8x1xf32>
    %52 = arith.select %49, %50, %51 : vector<8x1xi1>, vector<8x1xf32>
    %cst_17 = arith.constant 1.000000e+00 : f32
    %cst_18 = arith.constant 0.000000e+00 : f32
    %53 = vector.broadcast %cst_17 : f32 to vector<8x1xf32>
    %54 = vector.broadcast %cst_18 : f32 to vector<8x1xf32>
    %55 = arith.select %49, %53, %54 : vector<8x1xi1>, vector<8x1xf32>
    %56 = vector.shape_cast %33 : vector<8x1xf32> to vector<1x8x1xf32>
    %cst_19 = arith.constant dense<0.000000e+00> : vector<1xf32>
    %57 = vector.multi_reduction <add>, %56, %cst_19 [1, 2] : vector<1x8x1xf32> to vector<1xf32>
    %58 = vector.shape_cast %57 : vector<1xf32> to vector<1x1x1xf32>
    %59 = vector.extract %58[0, 0, 0] : f32 from vector<1x1x1xf32>
    %60 = vector.shape_cast %52 : vector<8x1xf32> to vector<1x8x1xf32>
    %cst_20 = arith.constant dense<0.000000e+00> : vector<1xf32>
    %61 = vector.multi_reduction <add>, %60, %cst_20 [1, 2] : vector<1x8x1xf32> to vector<1xf32>
    %62 = vector.shape_cast %61 : vector<1xf32> to vector<1x1x1xf32>
    %63 = vector.extract %62[0, 0, 0] : f32 from vector<1x1x1xf32>
    %64 = vector.shape_cast %55 : vector<8x1xf32> to vector<1x8x1xf32>
    %cst_21 = arith.constant dense<0.000000e+00> : vector<1xf32>
    %65 = vector.multi_reduction <add>, %64, %cst_21 [1, 2] : vector<1x8x1xf32> to vector<1xf32>
    %66 = vector.shape_cast %65 : vector<1xf32> to vector<1x1x1xf32>
    %67 = vector.extract %66[0, 0, 0] : f32 from vector<1x1x1xf32>
    %68 = tpu.iota {dimensions = array<i32: 1>} : vector<1x8x128xi32>
    %c0_i32 = arith.constant 0 : i32
    %69 = vector.broadcast %c0_i32 : i32 to vector<1x8x128xi32>
    %70 = arith.cmpi eq, %68, %69 : vector<1x8x128xi32>
    %c1_i32 = arith.constant 1 : i32
    %71 = vector.broadcast %c1_i32 : i32 to vector<1x8x128xi32>
    %72 = arith.cmpi eq, %68, %71 : vector<1x8x128xi32>
    %c2_i32 = arith.constant 2 : i32
    %73 = vector.broadcast %c2_i32 : i32 to vector<1x8x128xi32>
    %74 = arith.cmpi eq, %68, %73 : vector<1x8x128xi32>
    %cst_22 = arith.constant 0.000000e+00 : f32
    %75 = vector.broadcast %67 : f32 to vector<1x8x128xf32>
    %76 = vector.broadcast %cst_22 : f32 to vector<1x8x128xf32>
    %77 = arith.select %74, %75, %76 : vector<1x8x128xi1>, vector<1x8x128xf32>
    %78 = vector.broadcast %63 : f32 to vector<1x8x128xf32>
    %79 = arith.select %72, %78, %77 : vector<1x8x128xi1>, vector<1x8x128xf32>
    %80 = vector.broadcast %59 : f32 to vector<1x8x128xf32>
    %81 = arith.select %70, %80, %79 : vector<1x8x128xi1>, vector<1x8x128xf32>
    %c0_23 = arith.constant 0 : index
    %c0_24 = arith.constant 0 : index
    %c0_25 = arith.constant 0 : index
    %82 = vector.load %arg5[%c0_23, %c0_24, %c0_25] : memref<1x8x128xf32, #tpu.memory_space<vmem>>, vector<1x8x128xf32>
    tpu.vector_store %arg5[%c0_23, %c0_24, %c0_25], %81 {strides = array<i32>} : memref<1x8x128xf32, #tpu.memory_space<vmem>>, vector<1x8x128xf32>,
    return
  }
  func.func @transform_0(%arg0: i32, %arg1: memref<1xi32, #tpu.memory_space<smem>>) -> (i32, i32) {
    %c0_i32 = arith.constant 0 : i32
    %c0_i32_0 = arith.constant 0 : i32
    return %arg0, %c0_i32 : i32, i32
  }
  func.func @transform_1(%arg0: i32, %arg1: memref<1xi32, #tpu.memory_space<smem>>) -> (i32, i32) {
    %c0_i32 = arith.constant 0 : i32
    %c0_i32_0 = arith.constant 0 : i32
    return %arg0, %c0_i32 : i32, i32
  }
  func.func @transform_2(%arg0: i32, %arg1: memref<1xi32, #tpu.memory_space<smem>>) -> (i32, i32) {
    %c0_i32 = arith.constant 0 : i32
    %c0_i32_0 = arith.constant 0 : i32
    return %arg0, %c0_i32 : i32, i32
  }
  func.func @transform_3(%arg0: i32, %arg1: memref<1xi32, #tpu.memory_space<smem>>) -> (i32, i32, i32) {
    %c0_i32 = arith.constant 0 : i32
    %c0_i32_0 = arith.constant 0 : i32
    %c0_i32_1 = arith.constant 0 : i32
    return %arg0, %c0_i32, %c0_i32_0 : i32, i32, i32
  }
}

</mosaic_0001>

<llo_original>
// kernel: tpu_custom_call.1
$region0: #{tpu_custom_call.1}
  #allocation0 [shape = 'u32[]', space=smem, size = 0x4, offset = 0x4, fixed_abs, tag = 'smem constant byte address 0x4 - core index']
  #allocation1 [shape = 'u32[144,128]{1,0:T(1,128)}', space=vmem, size = 0x12000, scoped, tag = 'internal scratch']
  #allocation2 [shape = 's32[1]{0}', space=sflag, size = 0x4, scoped, tag = 'scoped memory for tpu_custom_call.1']
  #allocation3 [shape = 's32[1]{0:T(128)S(6)}', space=smem, size = 0x200, scoped, tag = 'prefetched SMEM operand 0']
  %s0 = inlined_call_operand.<no memory space> [shape: s32[1], index: 0, kind: input, shape index: {}]
  %s1 = inlined_call_operand.vmem [shape: f32[8,32], index: 1, kind: input, shape index: {}]
  %s2 = inlined_call_operand.hbm [shape: f32[8,32], index: 2, kind: input, shape index: {}]
  %s3 = inlined_call_operand.vmem [shape: s32[8,1], index: 3, kind: input, shape index: {}]
  %s4 = inlined_call_operand.hbm [shape: f32[1,8,128], index: 4, kind: output, shape index: {}]
  %s5 = sld [smem:[#allocation0]]
  $region26: #{tpu_custom_call.1} parent=0
    _
  %s7 = ssub.s32 1, %s5
  %s8 = scalar_select 0, %s7, %s5
  %9 = sst [smem:[#allocation3]] %s0
  $region1: #{tpu_custom_call.1} parent=0
    #allocation4 [shape = 'u8[4096]{0}', space=vmem, size = 0x1000, scoped, tag = 'input window, operand 2, single buffered']
    #allocation5 [shape = 's32[1]{0}', space=sflag, size = 0x4, scoped, tag = 'scoped memory for tpu_custom_call.1']
    #allocation6 [shape = 's32[1]{0}', space=sflag, size = 0x4, scoped, tag = 'scoped memory for tpu_custom_call.1']
    #allocation7 [shape = 'u8[4096]{0}', space=vmem, size = 0x1000, scoped, tag = 'output window, operand 0, single buffered']
    %10 = vsyncpa [#allocation5], 0
    %11 = vsyncpa [#allocation6], 0
    // Predicated region
    $region2: #{tpu_custom_call.1} parent=1 // pred_check
      _
    $region3: #{tpu_custom_call.1} parent=1 // pred_check_branch
      %13 = sbr.rel (0) target = $region5
    $region4: #{tpu_custom_call.1} parent=1 // pred_region
      _
    $region5: #{tpu_custom_call.1} parent=1 // pred_fallthru
      _
    // Predicated region
    $region6: #{tpu_custom_call.1} parent=1 // pred_check
      _
    $region7: #{tpu_custom_call.1} parent=1 // pred_check_branch
      %15 = sbr.rel (0) target = $region9
    $region8: #{tpu_custom_call.1} parent=1 // pred_region
      %s17 = ssub.s32 128, 128
      %18 = vsyncadd [#allocation5], %s17
      %s20 = sshll.u32 [#allocation4], 4
      %s21 = int_to_ptr.vmem [resolvable:$true] %s20
      %23 = dma.hbm_to_vmem [thread:$0]  %s2, 128, %s21, [#allocation5]
    $region9: #{tpu_custom_call.1} parent=1 // pred_fallthru
      _
    // Predicated region
    $region10: #{tpu_custom_call.1} parent=1 // pred_check
      _
    $region11: #{tpu_custom_call.1} parent=1 // pred_check_branch
      %25 = sbr.rel (0) target = $region13
    $region12: #{tpu_custom_call.1} parent=1 // pred_region
      _
    $region13: #{tpu_custom_call.1} parent=1 // pred_fallthru
      _
    // Predicated region
    $region14: #{tpu_custom_call.1} parent=1 // pred_check
      _
    $region15: #{tpu_custom_call.1} parent=1 // pred_check_branch
      %27 = sbr.rel (0) target = $region17
    $region16: #{tpu_custom_call.1} parent=1 // pred_region
      %28 = dma.done [#allocation5], 128
    $region17: #{tpu_custom_call.1} parent=1 // pred_fallthru
      _
    %v29 = vld [vmem:[%s1] sm:$0xff]
    %v30 = vld [vmem:[#allocation4] sm:$0xff]
    %v31 = vld [vmem:[%s3] sm:$0xff]
    %s32 = sld [smem:[#allocation3]]
    %s33 = smul.u32 0, 8
    %v34 = vlaneseq
    %v35 = vshrl.u32 %v34, 7
    %v36 = vstv %s33
    %v37 = vadd.s32 %v36, %v35
    %v38 = vstv %s32
    %vm39 = vcmp.lt.s32.totalorder %v37, %v38
    %vm40 = vcmask 261120
    %v41 = vsel %vm40, %v30, -inf
    %42 = vmax.xlane.f32.xlu0 %v41
    %v43 = vpop.xlane.xlu0 %42
    %v44 = vsub.f32 %v30, %v43
    %v45 = vmul.f32 %v44, 1.442695
    %v46 = vpow.pop %v45
    %v47 = vsel %vm40, %v46, 0.0
    %48 = vadd.xlane.f32.xlu0 %v47
    %v49 = vpop.xlane.xlu0 %48
    %v50 = vmul.f32 %v29, 0.5
    %v51 = vsel %vm40, %v50, -inf
    %52 = vmax.xlane.f32.xlu0 %v51
    %v53 = vpop.xlane.xlu0 %52
    %v54 = vsub.f32 %v50, %v53
    %v55 = vmul.f32 %v54, 1.442695
    %v56 = vpow.pop %v55
    %v57 = vsel %vm40, %v56, 0.0
    %58 = vadd.xlane.f32.xlu0 %v57
    %v59 = vpop.xlane.xlu0 %58
    %v60 = vlog2.pop %v59
    %v61 = vmul.f32 %v60, 0.6931472
    %v62 = vmul.f32 %v46, %v54
    %v63 = vsel %vm40, %v62, 0.0
    %64 = vadd.xlane.f32.xlu0 %v63
    %v65 = vpop.xlane.xlu0 %64
    %v66 = vrcp.pop %v49
    %v67 = vmul.f32 %v65, %v66
    %v68 = vsub.f32 %v61, %v67
    %v69 = vsel %vm39, %v68, 0.0
    %v70 = vmul.f32 %v54, 2.0
    %v71 = vmul.f32 %v70, 1.442695
    %v72 = vpow.pop %v71
    %v73 = vsel %vm40, %v72, 0.0
    %74 = vadd.xlane.f32.xlu0 %v73
    %v75 = vpop.xlane.xlu0 %74
    %v76 = vlog2.pop %v75
    %v77 = vmul.f32 %v76, 0.6931472
    %v78 = vlaneseq
    %v79 = vand.u32 %v78, 127
    %80 = vset.pattern.permute.xlu0 0
    %81 = vperm.xlu0 %80, %v31
    %v82 = vpop.permute.xlu0 %81
    %vm83 = vcmp.eq.s32.totalorder %v79, %v82
    %v84 = vsel %vm83, %v70, 0.0
    %v85 = vsel %vm40, %v84, 0.0
    %86 = vadd.xlane.f32.xlu0 %v85
    %v87 = vpop.xlane.xlu0 %86
    %vm88 = vcmp.ne.s32.totalorder %v31, 4294967196
    %vm89 = vmand %vm39, %vm88
    %v90 = vsub.f32 %v77, %v87
    %v91 = vsel %vm89, %v90, 0.0
    %v92 = vsel %vm89, 1.0, 0.0
    %vm93 = vcmask 7168
    %v94 = vsel %vm93, %v69, 0.0
    %95 = vadd.xlane.f32.xlu0 %v94
    %v96 = vpop.xlane.xlu0 %95
    %v97 = vrot.slane %v96, 4
    %v98 = vadd.f32 %v96, %v97
    %v99 = vrot.slane %v98, 2
    %v100 = vadd.f32 %v98, %v99
    %v101 = vrot.slane %v100, 1
    %v102 = vadd.f32 %v100, %v101
    %s103 = vtos %v102
    %v104 = vsel %vm93, %v91, 0.0
    %105 = vadd.xlane.f32.xlu0 %v104
    %v106 = vpop.xlane.xlu0 %105
    %v107 = vrot.slane %v106, 4
    %v108 = vadd.f32 %v106, %v107
    %v109 = vrot.slane %v108, 2
    %v110 = vadd.f32 %v108, %v109
    %v111 = vrot.slane %v110, 1
    %v112 = vadd.f32 %v110, %v111
    %s113 = vtos %v112
    %v114 = vsel %vm93, %v92, 0.0
    %115 = vadd.xlane.f32.xlu0 %v114
    %v116 = vpop.xlane.xlu0 %115
    %v117 = vrot.slane %v116, 4
    %v118 = vadd.f32 %v116, %v117
    %v119 = vrot.slane %v118, 2
    %v120 = vadd.f32 %v118, %v119
    %v121 = vrot.slane %v120, 1
    %v122 = vadd.f32 %v120, %v121
    %s123 = vtos %v122
    %vm124 = vcmp.eq.s32.totalorder %v35, 0
    %vm125 = vcmp.eq.s32.totalorder %v35, 1
    %vm126 = vcmp.eq.s32.totalorder %v35, 2
    %v127 = vstv %s123
    %v128 = vsel %vm126, %v127, 0.0
    %v129 = vstv %s113
    %v130 = vsel %vm125, %v129, %v128
    %v131 = vstv %s103
    %v132 = vsel %vm124, %v131, %v130
    %133 = vst [vmem:[#allocation7] sm:$0xff] %v132
    // Predicated region
    $region18: #{tpu_custom_call.1} parent=1 // pred_check
      _
    $region19: #{tpu_custom_call.1} parent=1 // pred_check_branch
      %135 = sbr.rel (0) target = $region21
    $region20: #{tpu_custom_call.1} parent=1 // pred_region
      %s137 = ssub.s32 128, 128
      %138 = vsyncadd [#allocation6], %s137
      %s140 = sshll.u32 [#allocation7], 4
      %s141 = int_to_ptr.vmem [resolvable:$true] %s140
      %143 = dma.vmem_to_hbm [thread:$0]  %s141, 128, %s4, [#allocation6]
    $region21: #{tpu_custom_call.1} parent=1 // pred_fallthru
      _
    // Predicated region
    $region22: #{tpu_custom_call.1} parent=1 // pred_check
      _
    $region23: #{tpu_custom_call.1} parent=1 // pred_check_branch
      %145 = sbr.rel (0) target = $region25
    $region24: #{tpu_custom_call.1} parent=1 // pred_region
      %146 = dma.done [#allocation6], 128
    $region25: #{tpu_custom_call.1} parent=1 // pred_fallthru
      _
    %147 = vsyncpa [#allocation5], 1
    %148 = vsyncpa [#allocation6], 1

</llo_original>
